<compile_context>
chip_gen: v7x
topology: tpu7x:2x2x1
jax: 0.10.0
libtpu: 0.0.40
codegen_flags: <defaults>
</compile_context>

<pallas_src>
from functools import partial

import jax
import jax.numpy as jnp
from jax.experimental import pallas as pl
from jax.experimental.pallas import tpu as pltpu


def _round_up(x, m):
    return -(-x // m) * m


def mapping_kernel(z_ref, wh_ref, bh_ref, wf_ref, bf_ref, out_ref, *,
                   num_layers, inv_latent_dim, compute_dtype, num_sub):
    """One batch tile of the whole mapping network.

    z_ref  : (TB, Dp)      latent tile (padded channels are zero), f32
    wh_ref : (L, Dp, Dp)   hidden weights, pre-transposed to (in_ch, out_ch),
                           WSConv2d scale folded in, compute dtype
    bh_ref : (L, Dp)       hidden biases, compute dtype
    wf_ref : (Dp, Wp)      final weight, (in_ch, out_ch), scale folded
    bf_ref : (1, Wp)       final bias, f32
    out_ref: (TB, Wp)      f32
    """
    tb = z_ref.shape[0]
    sub = tb // num_sub

    # PixelNorm (f32) per independent batch sub-chunk, then a single cast to
    # the MXU operand dtype.  num_sub > 1 gives the scheduler two independent
    # MXU -> VPU chains to interleave (hides the per-layer epilogue).
    chunks = []
    for s in range(num_sub):
        x = z_ref[pl.ds(s * sub, sub), :].astype(jnp.float32)
        ssq = jnp.sum(x * x, axis=1, keepdims=True)
        x = x * jax.lax.rsqrt(ssq * inv_latent_dim + 1e-8)
        chunks.append(x.astype(compute_dtype))

    # Hidden layers: K-major matmul (weights already (in, out), so no in-kernel
    # transpose), then bias add + LeakyReLU(0.2) done in the compute dtype.
    for l in range(num_layers):
        w = wh_ref[l]
        b = bh_ref[pl.ds(l, 1), :]
        nxt = []
        for x in chunks:
            y = jnp.dot(x, w, preferred_element_type=jnp.float32)
            y = y.astype(compute_dtype) + b
            nxt.append(jnp.maximum(y, 0.2 * y))
        chunks = nxt

    # Final projection to W space (f32 accumulate + f32 bias).
    wfin = wf_ref[...]
    bfin = bf_ref[...]
    for s, x in enumerate(chunks):
        out = jnp.dot(x, wfin, preferred_element_type=jnp.float32) + bfin
        out_ref[pl.ds(s * sub, sub), :] = out.astype(out_ref.dtype)


def prepare_mapping_params(weights_hidden, biases_hidden, weight_final,
                           bias_final, compute_dtype=jnp.bfloat16):
    """One-time (amortizable) parameter prep: WSConv2d scale fold, transpose to
    (in_ch, out_ch), pad channels to lane-dense multiples of 128, cast."""
    L, _, D = weights_hidden.shape
    W = weight_final.shape[0]
    scale = float((2.0 / D) ** 0.5)        # WSConv2d: sqrt(gain / (in_ch*k*k))
    Dp = _round_up(D, 128)
    Wp = _round_up(W, 128)

    wh = jnp.swapaxes(weights_hidden * scale, 1, 2)               # (L, in, out)
    wh = jnp.pad(wh, ((0, 0), (0, Dp - D), (0, Dp - D))).astype(compute_dtype)
    wf = jnp.pad((weight_final * scale).T,
                 ((0, Dp - D), (0, Wp - W))).astype(compute_dtype)
    bh = jnp.pad(biases_hidden, ((0, 0), (0, Dp - D))).astype(compute_dtype)
    bf = jnp.pad(bias_final.reshape(1, W),
                 ((0, 0), (0, Wp - W))).astype(jnp.float32)
    return dict(wh=wh, bh=bh, wf=wf, bf=bf, latent_dim=int(D), w_dim=int(W),
                compute_dtype=compute_dtype)


def _vmem_budget_and_limit():
    """(tile budget, vmem_limit_bytes, max batch tile) per chip generation."""
    try:
        cap = int(getattr(pltpu.get_tpu_info(), "vmem_capacity_bytes"))
    except Exception:
        cap = 64 * 1024 * 1024                        # conservative default
    if cap >= 100 * 1024 * 1024:                      # v5e / v6e: 128 MiB VMEM
        return 64 * 1024 * 1024, 96 * 1024 * 1024, 1024
    return 24 * 1024 * 1024, 32 * 1024 * 1024, 512    # v7x: 64 MiB per TC


def _pick_tile_b(B, Dp, Wp, L, w_bytes, z_bytes, budget, min_tile, max_tile):
    Bp8 = _round_up(B, 8)
    # Big lane/MXU-friendly tiles first (multiples of 128 rows).
    tile_b = min(max_tile, (Bp8 // 128) * 128) if Bp8 >= 128 else Bp8
    # At least 2 balanced grid steps whenever the batch permits, so
    # dimension_semantics=("parallel",) can shard across v7x's 2 TensorCores.
    if Bp8 >= 2 * min_tile:
        tile_b = min(tile_b, _round_up((Bp8 + 1) // 2, 8))
    tile_b = _round_up(max(tile_b, min_tile), 8)

    def vmem_needed(tb):
        # Weights/biases are single-buffered (pl.Buffered(1)); z/out tiles are
        # double-buffered by the default pipeline.
        resident = (L * Dp * Dp + Dp * Wp + L * Dp) * w_bytes + Wp * 4
        streamed = 2 * tb * Dp * z_bytes + 2 * tb * Wp * 4
        live = 4 * tb * Dp * 4                         # activation headroom
        return resident + streamed + live

    while tile_b > min_tile and vmem_needed(tile_b) > budget:
        tile_b = max(min_tile, (tile_b // 2) // 8 * 8)
    return tile_b


def mapping_network_apply(z, params):
    """z: (B, latent_dim) -> (B, w_dim, 1, 1), using prepared params."""
    B, D = z.shape
    assert D == params["latent_dim"], (D, params["latent_dim"])
    wh, bh, wf, bf = params["wh"], params["bh"], params["wf"], params["bf"]
    compute_dtype = params["compute_dtype"]
    L, Dp, _ = wh.shape
    Wp = wf.shape[1]
    W = params["w_dim"]

    budget, vmem_limit, max_tile = _vmem_budget_and_limit()
    w_bytes = jnp.dtype(compute_dtype).itemsize
    min_tile = 16 if w_bytes < 4 else 8      # bf16: keep sublanes fully packed
    tile_b = _pick_tile_b(B, Dp, Wp, L, w_bytes, 4, budget, min_tile, max_tile)
    Bp = _round_up(B, tile_b)
    grid_n = Bp // tile_b
    num_sub = 2 if (tile_b >= 16 and tile_b % 16 == 0) else 1

    z_p = jnp.pad(z.astype(jnp.float32), ((0, Bp - B), (0, Dp - D)))

    kernel = partial(mapping_kernel, num_layers=L, inv_latent_dim=1.0 / D,
                     compute_dtype=compute_dtype, num_sub=num_sub)

    def run(single_buffer_weights):
        def wspec(shape, imap):
            if single_buffer_weights:
                return pl.BlockSpec(shape, imap, pipeline_mode=pl.Buffered(1))
            return pl.BlockSpec(shape, imap)

        out = pl.pallas_call(
            kernel,
            out_shape=jax.ShapeDtypeStruct((Bp, Wp), jnp.float32),
            grid=(grid_n,),
            in_specs=[
                pl.BlockSpec((tile_b, Dp), lambda i: (i, 0)),   # streamed z tile
                wspec((L, Dp, Dp), lambda i: (0, 0, 0)),        # resident weights
                wspec((L, Dp), lambda i: (0, 0)),
                wspec((Dp, Wp), lambda i: (0, 0)),
                wspec((1, Wp), lambda i: (0, 0)),
            ],
            out_specs=pl.BlockSpec((tile_b, Wp), lambda i: (i, 0)),
            compiler_params=pltpu.CompilerParams(
                dimension_semantics=("parallel",),               # megacore on v7x
                vmem_limit_bytes=vmem_limit),
        )(z_p, wh, bh, wf, bf)
        return jax.block_until_ready(out)

    try:
        out2d = run(True)
    except Exception:
        # Fallback if single-buffered pipeline_mode is unavailable in this jax.
        out2d = run(False)

    # Glue only: trim padding and restore the NCHW (B, W, 1, 1) view.
    return out2d[:B, :W].reshape(B, W, 1, 1)


def mapping_network_forward(z, weights_hidden, biases_hidden, weight_final,
                            bias_final, compute_dtype=jnp.bfloat16):
    """Convenience wrapper (prep + apply).  Prefer calling
    prepare_mapping_params once and mapping_network_apply per batch."""
    params = prepare_mapping_params(weights_hidden, biases_hidden, weight_final,
                                    bias_final, compute_dtype=compute_dtype)
    return mapping_network_apply(z, params)


def reference_forward(z, weights_hidden, biases_hidden, weight_final,
                      bias_final, compute_dtype=jnp.float32):
    """Pure-JAX mirror of the PyTorch module, applying the same operand casts
    as the kernel's compute_dtype path."""
    B, D = z.shape
    scale = (2.0 / D) ** 0.5
    x = z.astype(jnp.float32)
    x = x * jax.lax.rsqrt(jnp.sum(x * x, axis=1, keepdims=True) * (1.0 / D) + 1e-8)
    x = x.astype(compute_dtype)
    for l in range(weights_hidden.shape[0]):
        w = (weights_hidden[l] * scale).astype(compute_dtype)
        y = jnp.dot(x, w.T, preferred_element_type=jnp.float32)
        y = y.astype(compute_dtype) + biases_hidden[l].astype(compute_dtype)
        x = jnp.maximum(y, 0.2 * y)
    w = (weight_final * scale).astype(compute_dtype)
    out = jnp.dot(x, w.T, preferred_element_type=jnp.float32) + bias_final
    return out.reshape(B, -1, 1, 1)


def _run_case(name, key, batch, latent_dim, layers, w_dim, compute_dtype,
              atol, rtol):
    kz, kw, kb, kwf, kbf = jax.random.split(key, 5)
    z = jax.random.normal(kz, (batch, latent_dim), dtype=jnp.float32)
    weights_hidden = jax.random.normal(
        kw, (layers, latent_dim, latent_dim), dtype=jnp.float32)
    biases_hidden = 0.1 * jax.random.normal(
        kb, (layers, latent_dim), dtype=jnp.float32)
    weight_final = jax.random.normal(kwf, (w_dim, latent_dim), dtype=jnp.float32)
    bias_final = 0.1 * jax.random.normal(kbf, (w_dim,), dtype=jnp.float32)

    # Prep once (amortizable across calls), then run the kernel.
    params = prepare_mapping_params(weights_hidden, biases_hidden,
                                    weight_final, bias_final,
                                    compute_dtype=compute_dtype)
    out = jax.block_until_ready(mapping_network_apply(z, params))
    ref = reference_forward(z, weights_hidden, biases_hidden, weight_final,
                            bias_final, compute_dtype=compute_dtype)
    assert out.shape == (batch, w_dim, 1, 1), (name, out.shape)
    err = float(jnp.max(jnp.abs(out - ref)))
    assert jnp.allclose(out, ref, atol=atol, rtol=rtol), (name, err)


if __name__ == "__main__":
    key = jax.random.PRNGKey(0)
    k1, k2, k3, k4 = jax.random.split(key, 4)

    # MappingNetwork(latent_dim=32, layers=3, w_dim=32), batch=8: f32 strict
    # check and bf16 MXU path (production default on v6e/v7x).
    _run_case("f32_small", k1, 8, 32, 3, 32, jnp.float32, 1e-3, 1e-3)
    _run_case("bf16_small", k2, 8, 32, 3, 32, jnp.bfloat16, 2e-2, 2e-2)

    # Padded-lane + multi-tile coverage: D, W not multiples of 128 and B not a
    # multiple of the batch tile (grid has 2 steps).
    _run_case("f32_padded_multitile", k3, 45, 96, 2, 80, jnp.float32, 1e-3, 1e-3)

    # Two grid steps + in-kernel interleaved sub-tile path.
    _run_case("f32_interleaved", k4, 64, 32, 2, 48, jnp.float32, 1e-3, 1e-3)

    print("KERNEL_OK")
</pallas_src>

<mosaic_0001>
module attributes {stable_mosaic.version = 11 : i64} {
  func.func @mapping_kernel(%arg0: i32, %arg1: memref<8x128xf32, #tpu.memory_space<vmem>>, %arg2: memref<3x128x128xf32, #tpu.memory_space<vmem>>, %arg3: memref<3x128xf32, #tpu.memory_space<vmem>>, %arg4: memref<128x128xf32, #tpu.memory_space<vmem>>, %arg5: memref<1x128xf32, #tpu.memory_space<vmem>>, %arg6: memref<8x128xf32, #tpu.memory_space<vmem>>) attributes {dimension_semantics = [#tpu.dimension_semantics<parallel>], iteration_bounds = array<i64: 1>, scalar_prefetch = 0 : i64, scratch_operands = 0 : i64, tpu.core_type = #tpu.core_type<tc>, window_params = [{transform_indices = @transform_0, window_bounds = array<i64: 8, 128>}, {pipeline_mode = #tpu.pipeline_mode<synchronous>, transform_indices = @transform_1, window_bounds = array<i64: 3, 128, 128>}, {pipeline_mode = #tpu.pipeline_mode<synchronous>, transform_indices = @transform_2, window_bounds = array<i64: 3, 128>}, {pipeline_mode = #tpu.pipeline_mode<synchronous>, transform_indices = @transform_3, window_bounds = array<i64: 128, 128>}, {pipeline_mode = #tpu.pipeline_mode<synchronous>, transform_indices = @transform_4, window_bounds = array<i64: 1, 128>}, {transform_indices = @transform_5, window_bounds = array<i64: 8, 128>}]} {
    %c0 = arith.constant 0 : index
    %c0_0 = arith.constant 0 : index
    %0 = vector.load %arg1[%c0, %c0_0] : memref<8x128xf32, #tpu.memory_space<vmem>>, vector<8x128xf32>
    %1 = arith.mulf %0, %0 : vector<8x128xf32>
    %cst = arith.constant dense<0.000000e+00> : vector<8xf32>
    %2 = vector.multi_reduction <add>, %1, %cst [1] : vector<8x128xf32> to vector<8xf32>
    %3 = vector.shape_cast %2 : vector<8xf32> to vector<8x1xf32>
    %cst_1 = arith.constant 3.125000e-02 : f32
    %4 = vector.broadcast %cst_1 : f32 to vector<8x1xf32>
    %5 = arith.mulf %3, %4 : vector<8x1xf32>
    %cst_2 = arith.constant 9.99999993E-9 : f32
    %6 = vector.broadcast %cst_2 : f32 to vector<8x1xf32>
    %7 = arith.addf %5, %6 : vector<8x1xf32>
    %8 = math.rsqrt %7 : vector<8x1xf32>
    %9 = vector.broadcast %8 : vector<8x1xf32> to vector<8x128xf32>
    %10 = arith.mulf %0, %9 : vector<8x128xf32>
    %c0_3 = arith.constant 0 : index
    %c0_4 = arith.constant 0 : index
    %c0_5 = arith.constant 0 : index
    %11 = vector.load %arg2[%c0_3, %c0_4, %c0_5] : memref<3x128x128xf32, #tpu.memory_space<vmem>>, vector<1x128x128xf32>
    %12 = vector.shape_cast %11 : vector<1x128x128xf32> to vector<128x128xf32>
    %c0_6 = arith.constant 0 : index
    %c0_7 = arith.constant 0 : index
    %13 = vector.load %arg3[%c0_6, %c0_7] : memref<3x128xf32, #tpu.memory_space<vmem>>, vector<1x128xf32>
    %cst_8 = arith.constant dense<0.000000e+00> : vector<8x128xf32>
    %14 = tpu.matmul %10, %12, %cst_8 {dimension_numbers = #tpu.dot_dimension_numbers<[1], [0], [0], [1], [0, 0, 1, 1], [], []>} : vector<8x128xf32>, vector<128x128xf32>, vector<8x128xf32> -> vector<8x128xf32>
    %15 = vector.broadcast %13 : vector<1x128xf32> to vector<8x128xf32>
    %16 = arith.addf %14, %15 : vector<8x128xf32>
    %cst_9 = arith.constant 2.000000e-01 : f32
    %17 = vector.broadcast %cst_9 : f32 to vector<8x128xf32>
    %18 = arith.mulf %17, %16 : vector<8x128xf32>
    %19 = arith.maximumf %16, %18 : vector<8x128xf32>
    %c1 = arith.constant 1 : index
    %c0_10 = arith.constant 0 : index
    %c0_11 = arith.constant 0 : index
    %20 = vector.load %arg2[%c1, %c0_10, %c0_11] : memref<3x128x128xf32, #tpu.memory_space<vmem>>, vector<1x128x128xf32>
    %21 = vector.shape_cast %20 : vector<1x128x128xf32> to vector<128x128xf32>
    %c1_12 = arith.constant 1 : index
    %c0_13 = arith.constant 0 : index
    %22 = vector.load %arg3[%c1_12, %c0_13] : memref<3x128xf32, #tpu.memory_space<vmem>>, vector<1x128xf32>
    %cst_14 = arith.constant dense<0.000000e+00> : vector<8x128xf32>
    %23 = tpu.matmul %19, %21, %cst_14 {dimension_numbers = #tpu.dot_dimension_numbers<[1], [0], [0], [1], [0, 0, 1, 1], [], []>} : vector<8x128xf32>, vector<128x128xf32>, vector<8x128xf32> -> vector<8x128xf32>
    %24 = vector.broadcast %22 : vector<1x128xf32> to vector<8x128xf32>
    %25 = arith.addf %23, %24 : vector<8x128xf32>
    %cst_15 = arith.constant 2.000000e-01 : f32
    %26 = vector.broadcast %cst_15 : f32 to vector<8x128xf32>
    %27 = arith.mulf %26, %25 : vector<8x128xf32>
    %28 = arith.maximumf %25, %27 : vector<8x128xf32>
    %c2 = arith.constant 2 : index
    %c0_16 = arith.constant 0 : index
    %c0_17 = arith.constant 0 : index
    %29 = vector.load %arg2[%c2, %c0_16, %c0_17] : memref<3x128x128xf32, #tpu.memory_space<vmem>>, vector<1x128x128xf32>
    %30 = vector.shape_cast %29 : vector<1x128x128xf32> to vector<128x128xf32>
    %c2_18 = arith.constant 2 : index
    %c0_19 = arith.constant 0 : index
    %31 = vector.load %arg3[%c2_18, %c0_19] : memref<3x128xf32, #tpu.memory_space<vmem>>, vector<1x128xf32>
    %cst_20 = arith.constant dense<0.000000e+00> : vector<8x128xf32>
    %32 = tpu.matmul %28, %30, %cst_20 {dimension_numbers = #tpu.dot_dimension_numbers<[1], [0], [0], [1], [0, 0, 1, 1], [], []>} : vector<8x128xf32>, vector<128x128xf32>, vector<8x128xf32> -> vector<8x128xf32>
    %33 = vector.broadcast %31 : vector<1x128xf32> to vector<8x128xf32>
    %34 = arith.addf %32, %33 : vector<8x128xf32>
    %cst_21 = arith.constant 2.000000e-01 : f32
    %35 = vector.broadcast %cst_21 : f32 to vector<8x128xf32>
    %36 = arith.mulf %35, %34 : vector<8x128xf32>
    %37 = arith.maximumf %34, %36 : vector<8x128xf32>
    %c0_22 = arith.constant 0 : index
    %c0_23 = arith.constant 0 : index
    %38 = vector.load %arg4[%c0_22, %c0_23] : memref<128x128xf32, #tpu.memory_space<vmem>>, vector<128x128xf32>
    %c0_24 = arith.constant 0 : index
    %c0_25 = arith.constant 0 : index
    %39 = vector.load %arg5[%c0_24, %c0_25] : memref<1x128xf32, #tpu.memory_space<vmem>>, vector<1x128xf32>
    %cst_26 = arith.constant dense<0.000000e+00> : vector<8x128xf32>
    %40 = tpu.matmul %37, %38, %cst_26 {dimension_numbers = #tpu.dot_dimension_numbers<[1], [0], [0], [1], [0, 0, 1, 1], [], []>} : vector<8x128xf32>, vector<128x128xf32>, vector<8x128xf32> -> vector<8x128xf32>
    %41 = vector.broadcast %39 : vector<1x128xf32> to vector<8x128xf32>
    %42 = arith.addf %40, %41 : vector<8x128xf32>
    %c0_27 = arith.constant 0 : index
    %c0_28 = arith.constant 0 : index
    %43 = vector.load %arg6[%c0_27, %c0_28] : memref<8x128xf32, #tpu.memory_space<vmem>>, vector<8x128xf32>
    tpu.vector_store %arg6[%c0_27, %c0_28], %42 {strides = array<i32>} : memref<8x128xf32, #tpu.memory_space<vmem>>, vector<8x128xf32>,
    return
  }
  func.func @transform_0(%arg0: i32) -> (i32, i32) {
    %c0_i32 = arith.constant 0 : i32
    %c0_i32_0 = arith.constant 0 : i32
    return %arg0, %c0_i32 : i32, i32
  }
  func.func @transform_1(%arg0: i32) -> (i32, i32, i32) {
    %c0_i32 = arith.constant 0 : i32
    %c0_i32_0 = arith.constant 0 : i32
    %c0_i32_1 = arith.constant 0 : i32
    %c0_i32_2 = arith.constant 0 : i32
    return %c0_i32, %c0_i32_0, %c0_i32_1 : i32, i32, i32
  }
  func.func @transform_2(%arg0: i32) -> (i32, i32) {
    %c0_i32 = arith.constant 0 : i32
    %c0_i32_0 = arith.constant 0 : i32
    %c0_i32_1 = arith.constant 0 : i32
    return %c0_i32, %c0_i32_0 : i32, i32
  }
  func.func @transform_3(%arg0: i32) -> (i32, i32) {
    %c0_i32 = arith.constant 0 : i32
    %c0_i32_0 = arith.constant 0 : i32
    %c0_i32_1 = arith.constant 0 : i32
    return %c0_i32, %c0_i32_0 : i32, i32
  }
  func.func @transform_4(%arg0: i32) -> (i32, i32) {
    %c0_i32 = arith.constant 0 : i32
    %c0_i32_0 = arith.constant 0 : i32
    %c0_i32_1 = arith.constant 0 : i32
    return %c0_i32, %c0_i32_0 : i32, i32
  }
  func.func @transform_5(%arg0: i32) -> (i32, i32) {
    %c0_i32 = arith.constant 0 : i32
    %c0_i32_0 = arith.constant 0 : i32
    return %arg0, %c0_i32 : i32, i32
  }
}

module attributes {stable_mosaic.version = 11 : i64} {
  func.func @mapping_kernel(%arg0: i32, %arg1: memref<8x128xf32, #tpu.memory_space<vmem>>, %arg2: memref<3x128x128xf32, #tpu.memory_space<vmem>>, %arg3: memref<3x128xf32, #tpu.memory_space<vmem>>, %arg4: memref<128x128xf32, #tpu.memory_space<vmem>>, %arg5: memref<1x128xf32, #tpu.memory_space<vmem>>, %arg6: memref<8x128xf32, #tpu.memory_space<vmem>>) attributes {dimension_semantics = [#tpu.dimension_semantics<parallel>], iteration_bounds = array<i64: 1>, scalar_prefetch = 0 : i64, scratch_operands = 0 : i64, tpu.core_type = #tpu.core_type<tc>, window_params = [{transform_indices = @transform_0, window_bounds = array<i64: 8, 128>}, {pipeline_mode = #tpu.pipeline_mode<synchronous>, transform_indices = @transform_1, window_bounds = array<i64: 3, 128, 128>}, {pipeline_mode = #tpu.pipeline_mode<synchronous>, transform_indices = @transform_2, window_bounds = array<i64: 3, 128>}, {pipeline_mode = #tpu.pipeline_mode<synchronous>, transform_indices = @transform_3, window_bounds = array<i64: 128, 128>}, {pipeline_mode = #tpu.pipeline_mode<synchronous>, transform_indices = @transform_4, window_bounds = array<i64: 1, 128>}, {transform_indices = @transform_5, window_bounds = array<i64: 8, 128>}]} {
    %c0 = arith.constant 0 : index
    %c0_0 = arith.constant 0 : index
    %0 = vector.load %arg1[%c0, %c0_0] : memref<8x128xf32, #tpu.memory_space<vmem>>, vector<8x128xf32>
    %1 = arith.mulf %0, %0 : vector<8x128xf32>
    %cst = arith.constant dense<0.000000e+00> : vector<8xf32>
    %2 = vector.multi_reduction <add>, %1, %cst [1] : vector<8x128xf32> to vector<8xf32>
    %3 = vector.shape_cast %2 : vector<8xf32> to vector<8x1xf32>
    %cst_1 = arith.constant 3.125000e-02 : f32
    %4 = vector.broadcast %cst_1 : f32 to vector<8x1xf32>
    %5 = arith.mulf %3, %4 : vector<8x1xf32>
    %cst_2 = arith.constant 9.99999993E-9 : f32
    %6 = vector.broadcast %cst_2 : f32 to vector<8x1xf32>
    %7 = arith.addf %5, %6 : vector<8x1xf32>
    %8 = math.rsqrt %7 : vector<8x1xf32>
    %9 = vector.broadcast %8 : vector<8x1xf32> to vector<8x128xf32>
    %10 = arith.mulf %0, %9 : vector<8x128xf32>
    %c0_3 = arith.constant 0 : index
    %c0_4 = arith.constant 0 : index
    %c0_5 = arith.constant 0 : index
    %11 = vector.load %arg2[%c0_3, %c0_4, %c0_5] : memref<3x128x128xf32, #tpu.memory_space<vmem>>, vector<1x128x128xf32>
    %12 = vector.shape_cast %11 : vector<1x128x128xf32> to vector<128x128xf32>
    %c0_6 = arith.constant 0 : index
    %c0_7 = arith.constant 0 : index
    %13 = vector.load %arg3[%c0_6, %c0_7] : memref<3x128xf32, #tpu.memory_space<vmem>>, vector<1x128xf32>
    %cst_8 = arith.constant dense<0.000000e+00> : vector<8x128xf32>
    %14 = tpu.matmul %10, %12, %cst_8 {dimension_numbers = #tpu.dot_dimension_numbers<[1], [0], [0], [1], [0, 0, 1, 1], [], []>} : vector<8x128xf32>, vector<128x128xf32>, vector<8x128xf32> -> vector<8x128xf32>
    %15 = vector.broadcast %13 : vector<1x128xf32> to vector<8x128xf32>
    %16 = arith.addf %14, %15 : vector<8x128xf32>
    %cst_9 = arith.constant 2.000000e-01 : f32
    %17 = vector.broadcast %cst_9 : f32 to vector<8x128xf32>
    %18 = arith.mulf %17, %16 : vector<8x128xf32>
    %19 = arith.maximumf %16, %18 : vector<8x128xf32>
    %c1 = arith.constant 1 : index
    %c0_10 = arith.constant 0 : index
    %c0_11 = arith.constant 0 : index
    %20 = vector.load %arg2[%c1, %c0_10, %c0_11] : memref<3x128x128xf32, #tpu.memory_space<vmem>>, vector<1x128x128xf32>
    %21 = vector.shape_cast %20 : vector<1x128x128xf32> to vector<128x128xf32>
    %c1_12 = arith.constant 1 : index
    %c0_13 = arith.constant 0 : index
    %22 = vector.load %arg3[%c1_12, %c0_13] : memref<3x128xf32, #tpu.memory_space<vmem>>, vector<1x128xf32>
    %cst_14 = arith.constant dense<0.000000e+00> : vector<8x128xf32>
    %23 = tpu.matmul %19, %21, %cst_14 {dimension_numbers = #tpu.dot_dimension_numbers<[1], [0], [0], [1], [0, 0, 1, 1], [], []>} : vector<8x128xf32>, vector<128x128xf32>, vector<8x128xf32> -> vector<8x128xf32>
    %24 = vector.broadcast %22 : vector<1x128xf32> to vector<8x128xf32>
    %25 = arith.addf %23, %24 : vector<8x128xf32>
    %cst_15 = arith.constant 2.000000e-01 : f32
    %26 = vector.broadcast %cst_15 : f32 to vector<8x128xf32>
    %27 = arith.mulf %26, %25 : vector<8x128xf32>
    %28 = arith.maximumf %25, %27 : vector<8x128xf32>
    %c2 = arith.constant 2 : index
    %c0_16 = arith.constant 0 : index
    %c0_17 = arith.constant 0 : index
    %29 = vector.load %arg2[%c2, %c0_16, %c0_17] : memref<3x128x128xf32, #tpu.memory_space<vmem>>, vector<1x128x128xf32>
    %30 = vector.shape_cast %29 : vector<1x128x128xf32> to vector<128x128xf32>
    %c2_18 = arith.constant 2 : index
    %c0_19 = arith.constant 0 : index
    %31 = vector.load %arg3[%c2_18, %c0_19] : memref<3x128xf32, #tpu.memory_space<vmem>>, vector<1x128xf32>
    %cst_20 = arith.constant dense<0.000000e+00> : vector<8x128xf32>
    %32 = tpu.matmul %28, %30, %cst_20 {dimension_numbers = #tpu.dot_dimension_numbers<[1], [0], [0], [1], [0, 0, 1, 1], [], []>} : vector<8x128xf32>, vector<128x128xf32>, vector<8x128xf32> -> vector<8x128xf32>
    %33 = vector.broadcast %31 : vector<1x128xf32> to vector<8x128xf32>
    %34 = arith.addf %32, %33 : vector<8x128xf32>
    %cst_21 = arith.constant 2.000000e-01 : f32
    %35 = vector.broadcast %cst_21 : f32 to vector<8x128xf32>
    %36 = arith.mulf %35, %34 : vector<8x128xf32>
    %37 = arith.maximumf %34, %36 : vector<8x128xf32>
    %c0_22 = arith.constant 0 : index
    %c0_23 = arith.constant 0 : index
    %38 = vector.load %arg4[%c0_22, %c0_23] : memref<128x128xf32, #tpu.memory_space<vmem>>, vector<128x128xf32>
    %c0_24 = arith.constant 0 : index
    %c0_25 = arith.constant 0 : index
    %39 = vector.load %arg5[%c0_24, %c0_25] : memref<1x128xf32, #tpu.memory_space<vmem>>, vector<1x128xf32>
    %cst_26 = arith.constant dense<0.000000e+00> : vector<8x128xf32>
    %40 = tpu.matmul %37, %38, %cst_26 {dimension_numbers = #tpu.dot_dimension_numbers<[1], [0], [0], [1], [0, 0, 1, 1], [], []>} : vector<8x128xf32>, vector<128x128xf32>, vector<8x128xf32> -> vector<8x128xf32>
    %41 = vector.broadcast %39 : vector<1x128xf32> to vector<8x128xf32>
    %42 = arith.addf %40, %41 : vector<8x128xf32>
    %c0_27 = arith.constant 0 : index
    %c0_28 = arith.constant 0 : index
    %43 = vector.load %arg6[%c0_27, %c0_28] : memref<8x128xf32, #tpu.memory_space<vmem>>, vector<8x128xf32>
    tpu.vector_store %arg6[%c0_27, %c0_28], %42 {strides = array<i32>} : memref<8x128xf32, #tpu.memory_space<vmem>>, vector<8x128xf32>,
    return
  }
  func.func @transform_0(%arg0: i32) -> (i32, i32) {
    %c0_i32 = arith.constant 0 : i32
    %c0_i32_0 = arith.constant 0 : i32
    return %arg0, %c0_i32 : i32, i32
  }
  func.func @transform_1(%arg0: i32) -> (i32, i32, i32) {
    %c0_i32 = arith.constant 0 : i32
    %c0_i32_0 = arith.constant 0 : i32
    %c0_i32_1 = arith.constant 0 : i32
    %c0_i32_2 = arith.constant 0 : i32
    return %c0_i32, %c0_i32_0, %c0_i32_1 : i32, i32, i32
  }
  func.func @transform_2(%arg0: i32) -> (i32, i32) {
    %c0_i32 = arith.constant 0 : i32
    %c0_i32_0 = arith.constant 0 : i32
    %c0_i32_1 = arith.constant 0 : i32
    return %c0_i32, %c0_i32_0 : i32, i32
  }
  func.func @transform_3(%arg0: i32) -> (i32, i32) {
    %c0_i32 = arith.constant 0 : i32
    %c0_i32_0 = arith.constant 0 : i32
    %c0_i32_1 = arith.constant 0 : i32
    return %c0_i32, %c0_i32_0 : i32, i32
  }
  func.func @transform_4(%arg0: i32) -> (i32, i32) {
    %c0_i32 = arith.constant 0 : i32
    %c0_i32_0 = arith.constant 0 : i32
    %c0_i32_1 = arith.constant 0 : i32
    return %c0_i32, %c0_i32_0 : i32, i32
  }
  func.func @transform_5(%arg0: i32) -> (i32, i32) {
    %c0_i32 = arith.constant 0 : i32
    %c0_i32_0 = arith.constant 0 : i32
    return %arg0, %c0_i32 : i32, i32
  }
}

</mosaic_0001>

<llo_original>
// kernel: tpu_custom_call.1
$region0: #{tpu_custom_call.1}
  #allocation0 [shape = 'u32[]', space=smem, size = 0x4, offset = 0x4, fixed_abs, tag = 'smem constant byte address 0x4 - core index']
  #allocation1 [shape = 'u32[144,128]{1,0:T(1,128)}', space=vmem, size = 0x12000, scoped, tag = 'internal scratch']
  %s0 = inlined_call_operand.hbm [shape: f32[8,128], index: 0, kind: input, shape index: {}]
  %s1 = inlined_call_operand.hbm [shape: f32[3,128,128], index: 1, kind: input, shape index: {}]
  %s2 = inlined_call_operand.vmem [shape: f32[3,128], index: 2, kind: input, shape index: {}]
  %s3 = inlined_call_operand.hbm [shape: f32[128,128], index: 3, kind: input, shape index: {}]
  %s4 = inlined_call_operand.vmem [shape: f32[1,128], index: 4, kind: input, shape index: {}]
  %s5 = inlined_call_operand.hbm [shape: f32[8,128], index: 5, kind: output, shape index: {}]
  %s6 = sld [smem:[#allocation0]]
  $region42: #{tpu_custom_call.1} parent=0
    _
  %s8 = ssub.s32 1, %s6
  %s9 = scalar_select 0, %s8, %s6
  $region1: #{tpu_custom_call.1} parent=0
    #allocation2 [shape = 'u8[4096]{0}', space=vmem, size = 0x1000, scoped, tag = 'input window, operand 0, single buffered']
    #allocation3 [shape = 's32[1]{0}', space=sflag, size = 0x4, scoped, tag = 'scoped memory for tpu_custom_call.1']
    #allocation4 [shape = 's32[1]{0}', space=sflag, size = 0x4, scoped, tag = 'scoped memory for tpu_custom_call.1']
    #allocation5 [shape = 'u8[196608]{0}', space=vmem, size = 0x30000, scoped, tag = 'input window, operand 1, single buffered']
    #allocation6 [shape = 's32[1]{0}', space=sflag, size = 0x4, scoped, tag = 'scoped memory for tpu_custom_call.1']
    #allocation7 [shape = 'u8[65536]{0}', space=vmem, size = 0x10000, scoped, tag = 'input window, operand 3, single buffered']
    #allocation8 [shape = 'u8[4096]{0}', space=vmem, size = 0x1000, scoped, tag = 'output window, operand 0, single buffered']
    %10 = vsyncpa [#allocation3], 0
    %11 = vsyncpa [#allocation6], 0
    %12 = vsyncpa [#allocation4], 0
    // Predicated region
    $region2: #{tpu_custom_call.1} parent=1 // pred_check
      _
    $region3: #{tpu_custom_call.1} parent=1 // pred_check_branch
      %14 = sbr.rel (0) target = $region5
    $region4: #{tpu_custom_call.1} parent=1 // pred_region
      %s16 = ssub.s32 128, 128
      %17 = vsyncadd [#allocation3], %s16
      %s19 = sshll.u32 [#allocation2], 4
      %s20 = int_to_ptr.vmem [resolvable:$true] %s19
      %22 = dma.hbm_to_vmem [thread:$0]  %s0, 128, %s20, [#allocation3]
    $region5: #{tpu_custom_call.1} parent=1 // pred_fallthru
      _
    // Predicated region
    $region6: #{tpu_custom_call.1} parent=1 // pred_check
      _
    $region7: #{tpu_custom_call.1} parent=1 // pred_check_branch
      %24 = sbr.rel (0) target = $region9
    $region8: #{tpu_custom_call.1} parent=1 // pred_region
      %s26 = ssub.s32 6144, 6144
      %27 = vsyncadd [#allocation6], %s26
      %s28 = sshll.u32 [#allocation5], 4
      %s29 = int_to_ptr.vmem [resolvable:$true] %s28
      %34 = dma.hbm_to_vmem [thread:$0]  %s1, 6144, %s29, [#allocation6], 128, 128, 8
    $region9: #{tpu_custom_call.1} parent=1 // pred_fallthru
      _
    // Predicated region
    $region10: #{tpu_custom_call.1} parent=1 // pred_check
      _
    $region11: #{tpu_custom_call.1} parent=1 // pred_check_branch
      %36 = sbr.rel (0) target = $region13
    $region12: #{tpu_custom_call.1} parent=1 // pred_region
      _
    $region13: #{tpu_custom_call.1} parent=1 // pred_fallthru
      _
    // Predicated region
    $region14: #{tpu_custom_call.1} parent=1 // pred_check
      _
    $region15: #{tpu_custom_call.1} parent=1 // pred_check_branch
      %38 = sbr.rel (0) target = $region17
    $region16: #{tpu_custom_call.1} parent=1 // pred_region
      %s40 = ssub.s32 2048, 2048
      %41 = vsyncadd [#allocation6], %s40
      %s42 = sshll.u32 [#allocation7], 4
      %s43 = int_to_ptr.vmem [resolvable:$true] %s42
      %48 = dma.hbm_to_vmem [thread:$0]  %s3, 2048, %s43, [#allocation6], 128, 128, 8
    $region17: #{tpu_custom_call.1} parent=1 // pred_fallthru
      _
    // Predicated region
    $region18: #{tpu_custom_call.1} parent=1 // pred_check
      _
    $region19: #{tpu_custom_call.1} parent=1 // pred_check_branch
      %50 = sbr.rel (0) target = $region21
    $region20: #{tpu_custom_call.1} parent=1 // pred_region
      _
    $region21: #{tpu_custom_call.1} parent=1 // pred_fallthru
      _
    // Predicated region
    $region22: #{tpu_custom_call.1} parent=1 // pred_check
      _
    $region23: #{tpu_custom_call.1} parent=1 // pred_check_branch
      %52 = sbr.rel (0) target = $region25
    $region24: #{tpu_custom_call.1} parent=1 // pred_region
      %53 = dma.done [#allocation3], 128
    $region25: #{tpu_custom_call.1} parent=1 // pred_fallthru
      _
    // Predicated region
    $region26: #{tpu_custom_call.1} parent=1 // pred_check
      _
    $region27: #{tpu_custom_call.1} parent=1 // pred_check_branch
      %55 = sbr.rel (0) target = $region29
    $region28: #{tpu_custom_call.1} parent=1 // pred_region
      %56 = dma.done [#allocation6], 6144
    $region29: #{tpu_custom_call.1} parent=1 // pred_fallthru
      _
    // Predicated region
    $region30: #{tpu_custom_call.1} parent=1 // pred_check
      _
    $region31: #{tpu_custom_call.1} parent=1 // pred_check_branch
      %58 = sbr.rel (0) target = $region33
    $region32: #{tpu_custom_call.1} parent=1 // pred_region
      %59 = dma.done [#allocation6], 2048
    $region33: #{tpu_custom_call.1} parent=1 // pred_fallthru
      _
    %v60 = vld [vmem:[#allocation2] sm:$0xff]
    %v61 = vmul.f32 %v60, %v60
    %62 = vadd.xlane.f32.xlu0 %v61
    %v63 = vpop.xlane.xlu0 %62
    %v64 = vmul.f32 %v63, 0.03125
    %v65 = vadd.f32 %v64, 1e-08
    %v66 = vrsqrt.pop %v65
    %v67 = vmul.f32 %v60, %v66
    %v68 = vld [vmem:[#allocation5] sm:$0xff]
    %v69 = vld [vmem:[#allocation5 + $0x8] sm:$0xff]
    %v70 = vld [vmem:[#allocation5 + $0x10] sm:$0xff]
    %v71 = vld [vmem:[#allocation5 + $0x18] sm:$0xff]
    %v72 = vld [vmem:[#allocation5 + $0x20] sm:$0xff]
    %v73 = vld [vmem:[#allocation5 + $0x28] sm:$0xff]
    %v74 = vld [vmem:[#allocation5 + $0x30] sm:$0xff]
    %v75 = vld [vmem:[#allocation5 + $0x38] sm:$0xff]
    %v76 = vld [vmem:[#allocation5 + $0x40] sm:$0xff]
    %v77 = vld [vmem:[#allocation5 + $0x48] sm:$0xff]
    %v78 = vld [vmem:[#allocation5 + $0x50] sm:$0xff]
    %v79 = vld [vmem:[#allocation5 + $0x58] sm:$0xff]
    %v80 = vld [vmem:[#allocation5 + $0x60] sm:$0xff]
    %v81 = vld [vmem:[#allocation5 + $0x68] sm:$0xff]
    %v82 = vld [vmem:[#allocation5 + $0x70] sm:$0xff]
    %v83 = vld [vmem:[#allocation5 + $0x78] sm:$0xff]
    %v84 = vld [vmem:[%s2] sm:$0x1]
    %v85 = vlaneseq
    %v86 = vshrl.u32 %v85, 7
    %v87 = vsub.s32 0, %v86
    %v88 = vrot.slane %v84, %v87
    %89 = vmatprep.subr.mxu0 0.0
    %90 = vmatpush1.msra.mxu0 %v68
    %91 = vmatprep.subr.mxu0 0.0
    %92 = vmatpush1.msra.mxu0 %v69
    %93 = vmatprep.subr.mxu0 0.0
    %94 = vmatpush1.msra.mxu0 %v70
    %95 = vmatprep.subr.mxu0 0.0
    %96 = vmatpush1.msra.mxu0 %v71
    %97 = vmatprep.subr.mxu0 0.0
    %98 = vmatpush1.msra.mxu0 %v72
    %99 = vmatprep.subr.mxu0 0.0
    %100 = vmatpush1.msra.mxu0 %v73
    %101 = vmatprep.subr.mxu0 0.0
    %102 = vmatpush1.msra.mxu0 %v74
    %103 = vmatprep.subr.mxu0 0.0
    %104 = vmatpush1.msra.mxu0 %v75
    %105 = vmatprep.subr.mxu0 0.0
    %106 = vmatpush1.msra.mxu0 %v76
    %107 = vmatprep.subr.mxu0 0.0
    %108 = vmatpush1.msra.mxu0 %v77
    %109 = vmatprep.subr.mxu0 0.0
    %110 = vmatpush1.msra.mxu0 %v78
    %111 = vmatprep.subr.mxu0 0.0
    %112 = vmatpush1.msra.mxu0 %v79
    %113 = vmatprep.subr.mxu0 0.0
    %114 = vmatpush1.msra.mxu0 %v80
    %115 = vmatprep.subr.mxu0 0.0
    %116 = vmatpush1.msra.mxu0 %v81
    %117 = vmatprep.subr.mxu0 0.0
    %118 = vmatpush1.msra.mxu0 %v82
    %119 = vmatprep.subr.mxu0 0.0
    %120 = vmatpush1.msra.mxu0 %v83
    %121 = vmatprep.subr.mxu0 0.0
    %122 = vmatpush1.msra.mxu0 0.0
    %123 = vmatprep.subr.mxu0 0.0
    %124 = vmatpush1.msra.mxu0 0.0
    %125 = vmatprep.subr.mxu0 0.0
    %126 = vmatpush1.msra.mxu0 0.0
    %127 = vmatprep.subr.mxu0 0.0
    %128 = vmatpush1.msra.mxu0 0.0
    %129 = vmatprep.subr.mxu0 0.0
    %130 = vmatpush1.msra.mxu0 0.0
    %131 = vmatprep.subr.mxu0 0.0
    %132 = vmatpush1.msra.mxu0 0.0
    %133 = vmatprep.subr.mxu0 0.0
    %134 = vmatpush1.msra.mxu0 0.0
    %135 = vmatprep.subr.mxu0 0.0
    %136 = vmatpush1.msra.mxu0 0.0
    %137 = vmatprep.subr.mxu0 0.0
    %138 = vmatpush1.msra.mxu0 0.0
    %139 = vmatprep.subr.mxu0 0.0
    %140 = vmatpush1.msra.mxu0 0.0
    %141 = vmatprep.subr.mxu0 0.0
    %142 = vmatpush1.msra.mxu0 0.0
    %143 = vmatprep.subr.mxu0 0.0
    %144 = vmatpush1.msra.mxu0 0.0
    %145 = vmatprep.subr.mxu0 0.0
    %146 = vmatpush1.msra.mxu0 0.0
    %147 = vmatprep.subr.mxu0 0.0
    %148 = vmatpush1.msra.mxu0 0.0
    %149 = vmatprep.subr.mxu0 0.0
    %150 = vmatpush1.msra.mxu0 0.0
    %151 = vmatprep.subr.mxu0 0.0
    %152 = vmatpush1.msra.mxu0 0.0
    %153 = vmatprep.mubr.f32.mxu0 0.0
    %154 = vmatmul.mubr.f32.gmra.mrb[0].mxu0 %v67
    %v155 = vpop.f32.mrb[0].mxu0
    %v156 = vadd.f32 %v88, %v155
    %v157 = vpop.f32.mrb[0].mxu0
    %158 = vdwg.mxu0
    %v159 = vmul.f32 %v156, 0.2
    %v160 = vmax.f32 %v156, %v159
    %s161 = scalar_lea.vmem [#allocation5], 128
    %v162 = vld [vmem:[%s161] sm:$0xff]
    %v163 = vld [vmem:[%s161 + $0x8] sm:$0xff]
    %v164 = vld [vmem:[%s161 + $0x10] sm:$0xff]
    %v165 = vld [vmem:[%s161 + $0x18] sm:$0xff]
    %v166 = vld [vmem:[%s161 + $0x20] sm:$0xff]
    %v167 = vld [vmem:[%s161 + $0x28] sm:$0xff]
    %v168 = vld [vmem:[%s161 + $0x30] sm:$0xff]
    %v169 = vld [vmem:[%s161 + $0x38] sm:$0xff]
    %v170 = vld [vmem:[%s161 + $0x40] sm:$0xff]
    %v171 = vld [vmem:[%s161 + $0x48] sm:$0xff]
    %v172 = vld [vmem:[%s161 + $0x50] sm:$0xff]
    %v173 = vld [vmem:[%s161 + $0x58] sm:$0xff]
    %v174 = vld [vmem:[%s161 + $0x60] sm:$0xff]
    %v175 = vld [vmem:[%s161 + $0x68] sm:$0xff]
    %v176 = vld [vmem:[%s161 + $0x70] sm:$0xff]
    %v177 = vld [vmem:[%s161 + $0x78] sm:$0xff]
    %v178 = vld [vmem:[%s2 + $0x1] sm:$0x1]
    %v179 = vlaneseq
    %v180 = vshrl.u32 %v179, 7
    %v181 = vsub.s32 0, %v180
    %v182 = vrot.slane %v178, %v181
    %183 = vmatprep.subr.mxu0 0.0
    %184 = vmatpush1.msra.mxu0 %v162
    %185 = vmatprep.subr.mxu0 0.0
    %186 = vmatpush1.msra.mxu0 %v163
    %187 = vmatprep.subr.mxu0 0.0
    %188 = vmatpush1.msra.mxu0 %v164
    %189 = vmatprep.subr.mxu0 0.0
    %190 = vmatpush1.msra.mxu0 %v165
    %191 = vmatprep.subr.mxu0 0.0
    %192 = vmatpush1.msra.mxu0 %v166
    %193 = vmatprep.subr.mxu0 0.0
    %194 = vmatpush1.msra.mxu0 %v167
    %195 = vmatprep.subr.mxu0 0.0
    %196 = vmatpush1.msra.mxu0 %v168
    %197 = vmatprep.subr.mxu0 0.0
    %198 = vmatpush1.msra.mxu0 %v169
    %199 = vmatprep.subr.mxu0 0.0
    %200 = vmatpush1.msra.mxu0 %v170
    %201 = vmatprep.subr.mxu0 0.0
    %202 = vmatpush1.msra.mxu0 %v171
    %203 = vmatprep.subr.mxu0 0.0
    %204 = vmatpush1.msra.mxu0 %v172
    %205 = vmatprep.subr.mxu0 0.0
    %206 = vmatpush1.msra.mxu0 %v173
    %207 = vmatprep.subr.mxu0 0.0
    %208 = vmatpush1.msra.mxu0 %v174
    %209 = vmatprep.subr.mxu0 0.0
    %210 = vmatpush1.msra.mxu0 %v175
    %211 = vmatprep.subr.mxu0 0.0
    %212 = vmatpush1.msra.mxu0 %v176
    %213 = vmatprep.subr.mxu0 0.0
    %214 = vmatpush1.msra.mxu0 %v177
    %215 = vmatprep.subr.mxu0 0.0
    %216 = vmatpush1.msra.mxu0 0.0
    %217 = vmatprep.subr.mxu0 0.0
    %218 = vmatpush1.msra.mxu0 0.0
    %219 = vmatprep.subr.mxu0 0.0
    %220 = vmatpush1.msra.mxu0 0.0
    %221 = vmatprep.subr.mxu0 0.0
    %222 = vmatpush1.msra.mxu0 0.0
    %223 = vmatprep.subr.mxu0 0.0
    %224 = vmatpush1.msra.mxu0 0.0
    %225 = vmatprep.subr.mxu0 0.0
    %226 = vmatpush1.msra.mxu0 0.0
    %227 = vmatprep.subr.mxu0 0.0
    %228 = vmatpush1.msra.mxu0 0.0
    %229 = vmatprep.subr.mxu0 0.0
    %230 = vmatpush1.msra.mxu0 0.0
    %231 = vmatprep.subr.mxu0 0.0
    %232 = vmatpush1.msra.mxu0 0.0
    %233 = vmatprep.subr.mxu0 0.0
    %234 = vmatpush1.msra.mxu0 0.0
    %235 = vmatprep.subr.mxu0 0.0
    %236 = vmatpush1.msra.mxu0 0.0
    %237 = vmatprep.subr.mxu0 0.0
    %238 = vmatpush1.msra.mxu0 0.0
    %239 = vmatprep.subr.mxu0 0.0
    %240 = vmatpush1.msra.mxu0 0.0
    %241 = vmatprep.subr.mxu0 0.0
    %242 = vmatpush1.msra.mxu0 0.0
    %243 = vmatprep.subr.mxu0 0.0
    %244 = vmatpush1.msra.mxu0 0.0
    %245 = vmatprep.subr.mxu0 0.0
    %246 = vmatpush1.msra.mxu0 0.0
    %247 = vmatprep.mubr.f32.mxu0 0.0
    %248 = vmatmul.mubr.f32.gmra.mrb[0].mxu0 %v160
    %v249 = vpop.f32.mrb[0].mxu0
    %v250 = vadd.f32 %v182, %v249
    %v251 = vpop.f32.mrb[0].mxu0
    %252 = vdwg.mxu0
    %v253 = vmul.f32 %v250, 0.2
    %v254 = vmax.f32 %v250, %v253
    %s255 = scalar_lea.vmem [#allocation5], 256
    %v256 = vld [vmem:[%s255] sm:$0xff]
    %v257 = vld [vmem:[%s255 + $0x8] sm:$0xff]
    %v258 = vld [vmem:[%s255 + $0x10] sm:$0xff]
    %v259 = vld [vmem:[%s255 + $0x18] sm:$0xff]
    %v260 = vld [vmem:[%s255 + $0x20] sm:$0xff]
    %v261 = vld [vmem:[%s255 + $0x28] sm:$0xff]
    %v262 = vld [vmem:[%s255 + $0x30] sm:$0xff]
    %v263 = vld [vmem:[%s255 + $0x38] sm:$0xff]
    %v264 = vld [vmem:[%s255 + $0x40] sm:$0xff]
    %v265 = vld [vmem:[%s255 + $0x48] sm:$0xff]
    %v266 = vld [vmem:[%s255 + $0x50] sm:$0xff]
    %v267 = vld [vmem:[%s255 + $0x58] sm:$0xff]
    %v268 = vld [vmem:[%s255 + $0x60] sm:$0xff]
    %v269 = vld [vmem:[%s255 + $0x68] sm:$0xff]
    %v270 = vld [vmem:[%s255 + $0x70] sm:$0xff]
    %v271 = vld [vmem:[%s255 + $0x78] sm:$0xff]
    %v272 = vld [vmem:[%s2 + $0x2] sm:$0x1]
    %v273 = vlaneseq
    %v274 = vshrl.u32 %v273, 7
    %v275 = vsub.s32 0, %v274
    %v276 = vrot.slane %v272, %v275
    %277 = vmatprep.subr.mxu0 0.0
    %278 = vmatpush1.msra.mxu0 %v256
    %279 = vmatprep.subr.mxu0 0.0
    %280 = vmatpush1.msra.mxu0 %v257
    %281 = vmatprep.subr.mxu0 0.0
    %282 = vmatpush1.msra.mxu0 %v258
    %283 = vmatprep.subr.mxu0 0.0
    %284 = vmatpush1.msra.mxu0 %v259
    %285 = vmatprep.subr.mxu0 0.0
    %286 = vmatpush1.msra.mxu0 %v260
    %287 = vmatprep.subr.mxu0 0.0
    %288 = vmatpush1.msra.mxu0 %v261
    %289 = vmatprep.subr.mxu0 0.0
    %290 = vmatpush1.msra.mxu0 %v262
    %291 = vmatprep.subr.mxu0 0.0
    %292 = vmatpush1.msra.mxu0 %v263
    %293 = vmatprep.subr.mxu0 0.0
    %294 = vmatpush1.msra.mxu0 %v264
    %295 = vmatprep.subr.mxu0 0.0
    %296 = vmatpush1.msra.mxu0 %v265
    %297 = vmatprep.subr.mxu0 0.0
    %298 = vmatpush1.msra.mxu0 %v266
    %299 = vmatprep.subr.mxu0 0.0
    %300 = vmatpush1.msra.mxu0 %v267
    %301 = vmatprep.subr.mxu0 0.0
    %302 = vmatpush1.msra.mxu0 %v268
    %303 = vmatprep.subr.mxu0 0.0
    %304 = vmatpush1.msra.mxu0 %v269
    %305 = vmatprep.subr.mxu0 0.0
    %306 = vmatpush1.msra.mxu0 %v270
    %307 = vmatprep.subr.mxu0 0.0
    %308 = vmatpush1.msra.mxu0 %v271
    %309 = vmatprep.subr.mxu0 0.0
    %310 = vmatpush1.msra.mxu0 0.0
    %311 = vmatprep.subr.mxu0 0.0
    %312 = vmatpush1.msra.mxu0 0.0
    %313 = vmatprep.subr.mxu0 0.0
    %314 = vmatpush1.msra.mxu0 0.0
    %315 = vmatprep.subr.mxu0 0.0
    %316 = vmatpush1.msra.mxu0 0.0
    %317 = vmatprep.subr.mxu0 0.0
    %318 = vmatpush1.msra.mxu0 0.0
    %319 = vmatprep.subr.mxu0 0.0
    %320 = vmatpush1.msra.mxu0 0.0
    %321 = vmatprep.subr.mxu0 0.0
    %322 = vmatpush1.msra.mxu0 0.0
    %323 = vmatprep.subr.mxu0 0.0
    %324 = vmatpush1.msra.mxu0 0.0
    %325 = vmatprep.subr.mxu0 0.0
    %326 = vmatpush1.msra.mxu0 0.0
    %327 = vmatprep.subr.mxu0 0.0
    %328 = vmatpush1.msra.mxu0 0.0
    %329 = vmatprep.subr.mxu0 0.0
    %330 = vmatpush1.msra.mxu0 0.0
    %331 = vmatprep.subr.mxu0 0.0
    %332 = vmatpush1.msra.mxu0 0.0
    %333 = vmatprep.subr.mxu0 0.0
    %334 = vmatpush1.msra.mxu0 0.0
    %335 = vmatprep.subr.mxu0 0.0
    %336 = vmatpush1.msra.mxu0 0.0
    %337 = vmatprep.subr.mxu0 0.0
    %338 = vmatpush1.msra.mxu0 0.0
    %339 = vmatprep.subr.mxu0 0.0
    %340 = vmatpush1.msra.mxu0 0.0
    %341 = vmatprep.mubr.f32.mxu0 0.0
    %342 = vmatmul.mubr.f32.gmra.mrb[0].mxu0 %v254
    %v343 = vpop.f32.mrb[0].mxu0
    %v344 = vadd.f32 %v276, %v343
    %v345 = vpop.f32.mrb[0].mxu0
    %346 = vdwg.mxu0
    %v347 = vmul.f32 %v344, 0.2
    %v348 = vmax.f32 %v344, %v347
    %v349 = vld [vmem:[#allocation7] sm:$0xff]
    %v350 = vld [vmem:[#allocation7 + $0x8] sm:$0xff]
    %v351 = vld [vmem:[#allocation7 + $0x10] sm:$0xff]
    %v352 = vld [vmem:[#allocation7 + $0x18] sm:$0xff]
    %v353 = vld [vmem:[#allocation7 + $0x20] sm:$0xff]
    %v354 = vld [vmem:[#allocation7 + $0x28] sm:$0xff]
    %v355 = vld [vmem:[#allocation7 + $0x30] sm:$0xff]
    %v356 = vld [vmem:[#allocation7 + $0x38] sm:$0xff]
    %v357 = vld [vmem:[#allocation7 + $0x40] sm:$0xff]
    %v358 = vld [vmem:[#allocation7 + $0x48] sm:$0xff]
    %v359 = vld [vmem:[#allocation7 + $0x50] sm:$0xff]
    %v360 = vld [vmem:[#allocation7 + $0x58] sm:$0xff]
    %v361 = vld [vmem:[#allocation7 + $0x60] sm:$0xff]
    %v362 = vld [vmem:[#allocation7 + $0x68] sm:$0xff]
    %v363 = vld [vmem:[#allocation7 + $0x70] sm:$0xff]
    %v364 = vld [vmem:[#allocation7 + $0x78] sm:$0xff]
    %v365 = vld [vmem:[%s4] sm:$0x1]
    %v367 = vlaneseq
    %v368 = vshrl.u32 %v367, 7
    %v369 = vsub.s32 0, %v368
    %v370 = vrot.slane %v365, %v369
    %372 = vmatprep.subr.mxu0 0.0
    %373 = vmatpush1.msra.mxu0 %v349
    %374 = vmatprep.subr.mxu0 0.0
    %375 = vmatpush1.msra.mxu0 %v350
    %376 = vmatprep.subr.mxu0 0.0
    %377 = vmatpush1.msra.mxu0 %v351
    %378 = vmatprep.subr.mxu0 0.0
    %379 = vmatpush1.msra.mxu0 %v352
    %380 = vmatprep.subr.mxu0 0.0
    %381 = vmatpush1.msra.mxu0 %v353
    %382 = vmatprep.subr.mxu0 0.0
    %383 = vmatpush1.msra.mxu0 %v354
    %384 = vmatprep.subr.mxu0 0.0
    %385 = vmatpush1.msra.mxu0 %v355
    %386 = vmatprep.subr.mxu0 0.0
    %387 = vmatpush1.msra.mxu0 %v356
    %388 = vmatprep.subr.mxu0 0.0
    %389 = vmatpush1.msra.mxu0 %v357
    %390 = vmatprep.subr.mxu0 0.0
    %391 = vmatpush1.msra.mxu0 %v358
    %392 = vmatprep.subr.mxu0 0.0
    %393 = vmatpush1.msra.mxu0 %v359
    %394 = vmatprep.subr.mxu0 0.0
    %395 = vmatpush1.msra.mxu0 %v360
    %396 = vmatprep.subr.mxu0 0.0
    %397 = vmatpush1.msra.mxu0 %v361
    %398 = vmatprep.subr.mxu0 0.0
    %399 = vmatpush1.msra.mxu0 %v362
    %400 = vmatprep.subr.mxu0 0.0
    %401 = vmatpush1.msra.mxu0 %v363
    %402 = vmatprep.subr.mxu0 0.0
    %403 = vmatpush1.msra.mxu0 %v364
    %404 = vmatprep.subr.mxu0 0.0
    %405 = vmatpush1.msra.mxu0 0.0
    %406 = vmatprep.subr.mxu0 0.0
    %407 = vmatpush1.msra.mxu0 0.0
    %408 = vmatprep.subr.mxu0 0.0
    %409 = vmatpush1.msra.mxu0 0.0
    %410 = vmatprep.subr.mxu0 0.0
    %411 = vmatpush1.msra.mxu0 0.0
    %412 = vmatprep.subr.mxu0 0.0
    %413 = vmatpush1.msra.mxu0 0.0
    %414 = vmatprep.subr.mxu0 0.0
    %415 = vmatpush1.msra.mxu0 0.0
    %416 = vmatprep.subr.mxu0 0.0
    %417 = vmatpush1.msra.mxu0 0.0
    %418 = vmatprep.subr.mxu0 0.0
    %419 = vmatpush1.msra.mxu0 0.0
    %420 = vmatprep.subr.mxu0 0.0
    %421 = vmatpush1.msra.mxu0 0.0
    %422 = vmatprep.subr.mxu0 0.0
    %423 = vmatpush1.msra.mxu0 0.0
    %424 = vmatprep.subr.mxu0 0.0
    %425 = vmatpush1.msra.mxu0 0.0
    %426 = vmatprep.subr.mxu0 0.0
    %427 = vmatpush1.msra.mxu0 0.0
    %428 = vmatprep.subr.mxu0 0.0
    %429 = vmatpush1.msra.mxu0 0.0
    %430 = vmatprep.subr.mxu0 0.0
    %431 = vmatpush1.msra.mxu0 0.0
    %432 = vmatprep.subr.mxu0 0.0
    %433 = vmatpush1.msra.mxu0 0.0
    %434 = vmatprep.subr.mxu0 0.0
    %435 = vmatpush1.msra.mxu0 0.0
    %436 = vmatprep.mubr.f32.mxu0 0.0
    %437 = vmatmul.mubr.f32.gmra.mrb[0].mxu0 %v348
    %v438 = vpop.f32.mrb[0].mxu0
    %v439 = vadd.f32 %v370, %v438
    %v440 = vpop.f32.mrb[0].mxu0
    %441 = vdwg.mxu0
    %442 = vst [vmem:[#allocation8] sm:$0xff] %v439
    // Predicated region
    $region34: #{tpu_custom_call.1} parent=1 // pred_check
      _
    $region35: #{tpu_custom_call.1} parent=1 // pred_check_branch
      %444 = sbr.rel (0) target = $region37
    $region36: #{tpu_custom_call.1} parent=1 // pred_region
      %s446 = ssub.s32 128, 128
      %447 = vsyncadd [#allocation4], %s446
      %s449 = sshll.u32 [#allocation8], 4
      %s450 = int_to_ptr.vmem [resolvable:$true] %s449
      %452 = dma.vmem_to_hbm [thread:$0]  %s450, 128, %s5, [#allocation4]
    $region37: #{tpu_custom_call.1} parent=1 // pred_fallthru
      _
    // Predicated region
    $region38: #{tpu_custom_call.1} parent=1 // pred_check
      _
    $region39: #{tpu_custom_call.1} parent=1 // pred_check_branch
      %454 = sbr.rel (0) target = $region41
    $region40: #{tpu_custom_call.1} parent=1 // pred_region
      %455 = dma.done [#allocation4], 128
    $region41: #{tpu_custom_call.1} parent=1 // pred_fallthru
      _
    %456 = vsyncpa [#allocation3], 1
    %457 = vsyncpa [#allocation6], 1
    %458 = vsyncpa [#allocation4], 1

// kernel: tpu_custom_call.1
$region0: #{tpu_custom_call.1}
  #allocation0 [shape = 'u32[]', space=smem, size = 0x4, offset = 0x4, fixed_abs, tag = 'smem constant byte address 0x4 - core index']
  #allocation1 [shape = 'u32[144,128]{1,0:T(1,128)}', space=vmem, size = 0x12000, scoped, tag = 'internal scratch']
  %s0 = inlined_call_operand.hbm [shape: f32[8,128], index: 0, kind: input, shape index: {}]
  %s1 = inlined_call_operand.hbm [shape: f32[3,128,128], index: 1, kind: input, shape index: {}]
  %s2 = inlined_call_operand.vmem [shape: f32[3,128], index: 2, kind: input, shape index: {}]
  %s3 = inlined_call_operand.hbm [shape: f32[128,128], index: 3, kind: input, shape index: {}]
  %s4 = inlined_call_operand.vmem [shape: f32[1,128], index: 4, kind: input, shape index: {}]
  %s5 = inlined_call_operand.hbm [shape: f32[8,128], index: 5, kind: output, shape index: {}]
  %s6 = sld [smem:[#allocation0]]
  $region42: #{tpu_custom_call.1} parent=0
    _
  %s8 = ssub.s32 1, %s6
  %s9 = scalar_select 0, %s8, %s6
  $region1: #{tpu_custom_call.1} parent=0
    #allocation2 [shape = 'u8[4096]{0}', space=vmem, size = 0x1000, scoped, tag = 'input window, operand 0, single buffered']
    #allocation3 [shape = 's32[1]{0}', space=sflag, size = 0x4, scoped, tag = 'scoped memory for tpu_custom_call.1']
    #allocation4 [shape = 's32[1]{0}', space=sflag, size = 0x4, scoped, tag = 'scoped memory for tpu_custom_call.1']
    #allocation5 [shape = 'u8[196608]{0}', space=vmem, size = 0x30000, scoped, tag = 'input window, operand 1, single buffered']
    #allocation6 [shape = 's32[1]{0}', space=sflag, size = 0x4, scoped, tag = 'scoped memory for tpu_custom_call.1']
    #allocation7 [shape = 'u8[65536]{0}', space=vmem, size = 0x10000, scoped, tag = 'input window, operand 3, single buffered']
    #allocation8 [shape = 'u8[4096]{0}', space=vmem, size = 0x1000, scoped, tag = 'output window, operand 0, single buffered']
    %10 = vsyncpa [#allocation3], 0
    %11 = vsyncpa [#allocation6], 0
    %12 = vsyncpa [#allocation4], 0
    // Predicated region
    $region2: #{tpu_custom_call.1} parent=1 // pred_check
      _
    $region3: #{tpu_custom_call.1} parent=1 // pred_check_branch
      %14 = sbr.rel (0) target = $region5
    $region4: #{tpu_custom_call.1} parent=1 // pred_region
      %s16 = ssub.s32 128, 128
      %17 = vsyncadd [#allocation3], %s16
      %s19 = sshll.u32 [#allocation2], 4
      %s20 = int_to_ptr.vmem [resolvable:$true] %s19
      %22 = dma.hbm_to_vmem [thread:$0]  %s0, 128, %s20, [#allocation3]
    $region5: #{tpu_custom_call.1} parent=1 // pred_fallthru
      _
    // Predicated region
    $region6: #{tpu_custom_call.1} parent=1 // pred_check
      _
    $region7: #{tpu_custom_call.1} parent=1 // pred_check_branch
      %24 = sbr.rel (0) target = $region9
    $region8: #{tpu_custom_call.1} parent=1 // pred_region
      %s26 = ssub.s32 6144, 6144
      %27 = vsyncadd [#allocation6], %s26
      %s28 = sshll.u32 [#allocation5], 4
      %s29 = int_to_ptr.vmem [resolvable:$true] %s28
      %34 = dma.hbm_to_vmem [thread:$0]  %s1, 6144, %s29, [#allocation6], 128, 128, 8
    $region9: #{tpu_custom_call.1} parent=1 // pred_fallthru
      _
    // Predicated region
    $region10: #{tpu_custom_call.1} parent=1 // pred_check
      _
    $region11: #{tpu_custom_call.1} parent=1 // pred_check_branch
      %36 = sbr.rel (0) target = $region13
    $region12: #{tpu_custom_call.1} parent=1 // pred_region
      _
    $region13: #{tpu_custom_call.1} parent=1 // pred_fallthru
      _
    // Predicated region
    $region14: #{tpu_custom_call.1} parent=1 // pred_check
      _
    $region15: #{tpu_custom_call.1} parent=1 // pred_check_branch
      %38 = sbr.rel (0) target = $region17
    $region16: #{tpu_custom_call.1} parent=1 // pred_region
      %s40 = ssub.s32 2048, 2048
      %41 = vsyncadd [#allocation6], %s40
      %s42 = sshll.u32 [#allocation7], 4
      %s43 = int_to_ptr.vmem [resolvable:$true] %s42
      %48 = dma.hbm_to_vmem [thread:$0]  %s3, 2048, %s43, [#allocation6], 128, 128, 8
    $region17: #{tpu_custom_call.1} parent=1 // pred_fallthru
      _
    // Predicated region
    $region18: #{tpu_custom_call.1} parent=1 // pred_check
      _
    $region19: #{tpu_custom_call.1} parent=1 // pred_check_branch
      %50 = sbr.rel (0) target = $region21
    $region20: #{tpu_custom_call.1} parent=1 // pred_region
      _
    $region21: #{tpu_custom_call.1} parent=1 // pred_fallthru
      _
    // Predicated region
    $region22: #{tpu_custom_call.1} parent=1 // pred_check
      _
    $region23: #{tpu_custom_call.1} parent=1 // pred_check_branch
      %52 = sbr.rel (0) target = $region25
    $region24: #{tpu_custom_call.1} parent=1 // pred_region
      %53 = dma.done [#allocation3], 128
    $region25: #{tpu_custom_call.1} parent=1 // pred_fallthru
      _
    // Predicated region
    $region26: #{tpu_custom_call.1} parent=1 // pred_check
      _
    $region27: #{tpu_custom_call.1} parent=1 // pred_check_branch
      %55 = sbr.rel (0) target = $region29
    $region28: #{tpu_custom_call.1} parent=1 // pred_region
      %56 = dma.done [#allocation6], 6144
    $region29: #{tpu_custom_call.1} parent=1 // pred_fallthru
      _
    // Predicated region
    $region30: #{tpu_custom_call.1} parent=1 // pred_check
      _
    $region31: #{tpu_custom_call.1} parent=1 // pred_check_branch
      %58 = sbr.rel (0) target = $region33
    $region32: #{tpu_custom_call.1} parent=1 // pred_region
      %59 = dma.done [#allocation6], 2048
    $region33: #{tpu_custom_call.1} parent=1 // pred_fallthru
      _
    %v60 = vld [vmem:[#allocation2] sm:$0xff]
    %v61 = vmul.f32 %v60, %v60
    %62 = vadd.xlane.f32.xlu0 %v61
    %v63 = vpop.xlane.xlu0 %62
    %v64 = vmul.f32 %v63, 0.03125
    %v65 = vadd.f32 %v64, 1e-08
    %v66 = vrsqrt.pop %v65
    %v67 = vmul.f32 %v60, %v66
    %v68 = vld [vmem:[#allocation5] sm:$0xff]
    %v69 = vld [vmem:[#allocation5 + $0x8] sm:$0xff]
    %v70 = vld [vmem:[#allocation5 + $0x10] sm:$0xff]
    %v71 = vld [vmem:[#allocation5 + $0x18] sm:$0xff]
    %v72 = vld [vmem:[#allocation5 + $0x20] sm:$0xff]
    %v73 = vld [vmem:[#allocation5 + $0x28] sm:$0xff]
    %v74 = vld [vmem:[#allocation5 + $0x30] sm:$0xff]
    %v75 = vld [vmem:[#allocation5 + $0x38] sm:$0xff]
    %v76 = vld [vmem:[#allocation5 + $0x40] sm:$0xff]
    %v77 = vld [vmem:[#allocation5 + $0x48] sm:$0xff]
    %v78 = vld [vmem:[#allocation5 + $0x50] sm:$0xff]
    %v79 = vld [vmem:[#allocation5 + $0x58] sm:$0xff]
    %v80 = vld [vmem:[#allocation5 + $0x60] sm:$0xff]
    %v81 = vld [vmem:[#allocation5 + $0x68] sm:$0xff]
    %v82 = vld [vmem:[#allocation5 + $0x70] sm:$0xff]
    %v83 = vld [vmem:[#allocation5 + $0x78] sm:$0xff]
    %v84 = vld [vmem:[%s2] sm:$0x1]
    %v85 = vlaneseq
    %v86 = vshrl.u32 %v85, 7
    %v87 = vsub.s32 0, %v86
    %v88 = vrot.slane %v84, %v87
    %89 = vmatprep.subr.mxu0 0.0
    %90 = vmatpush1.msra.mxu0 %v68
    %91 = vmatprep.subr.mxu0 0.0
    %92 = vmatpush1.msra.mxu0 %v69
    %93 = vmatprep.subr.mxu0 0.0
    %94 = vmatpush1.msra.mxu0 %v70
    %95 = vmatprep.subr.mxu0 0.0
    %96 = vmatpush1.msra.mxu0 %v71
    %97 = vmatprep.subr.mxu0 0.0
    %98 = vmatpush1.msra.mxu0 %v72
    %99 = vmatprep.subr.mxu0 0.0
    %100 = vmatpush1.msra.mxu0 %v73
    %101 = vmatprep.subr.mxu0 0.0
    %102 = vmatpush1.msra.mxu0 %v74
    %103 = vmatprep.subr.mxu0 0.0
    %104 = vmatpush1.msra.mxu0 %v75
    %105 = vmatprep.subr.mxu0 0.0
    %106 = vmatpush1.msra.mxu0 %v76
    %107 = vmatprep.subr.mxu0 0.0
    %108 = vmatpush1.msra.mxu0 %v77
    %109 = vmatprep.subr.mxu0 0.0
    %110 = vmatpush1.msra.mxu0 %v78
    %111 = vmatprep.subr.mxu0 0.0
    %112 = vmatpush1.msra.mxu0 %v79
    %113 = vmatprep.subr.mxu0 0.0
    %114 = vmatpush1.msra.mxu0 %v80
    %115 = vmatprep.subr.mxu0 0.0
    %116 = vmatpush1.msra.mxu0 %v81
    %117 = vmatprep.subr.mxu0 0.0
    %118 = vmatpush1.msra.mxu0 %v82
    %119 = vmatprep.subr.mxu0 0.0
    %120 = vmatpush1.msra.mxu0 %v83
    %121 = vmatprep.subr.mxu0 0.0
    %122 = vmatpush1.msra.mxu0 0.0
    %123 = vmatprep.subr.mxu0 0.0
    %124 = vmatpush1.msra.mxu0 0.0
    %125 = vmatprep.subr.mxu0 0.0
    %126 = vmatpush1.msra.mxu0 0.0
    %127 = vmatprep.subr.mxu0 0.0
    %128 = vmatpush1.msra.mxu0 0.0
    %129 = vmatprep.subr.mxu0 0.0
    %130 = vmatpush1.msra.mxu0 0.0
    %131 = vmatprep.subr.mxu0 0.0
    %132 = vmatpush1.msra.mxu0 0.0
    %133 = vmatprep.subr.mxu0 0.0
    %134 = vmatpush1.msra.mxu0 0.0
    %135 = vmatprep.subr.mxu0 0.0
    %136 = vmatpush1.msra.mxu0 0.0
    %137 = vmatprep.subr.mxu0 0.0
    %138 = vmatpush1.msra.mxu0 0.0
    %139 = vmatprep.subr.mxu0 0.0
    %140 = vmatpush1.msra.mxu0 0.0
    %141 = vmatprep.subr.mxu0 0.0
    %142 = vmatpush1.msra.mxu0 0.0
    %143 = vmatprep.subr.mxu0 0.0
    %144 = vmatpush1.msra.mxu0 0.0
    %145 = vmatprep.subr.mxu0 0.0
    %146 = vmatpush1.msra.mxu0 0.0
    %147 = vmatprep.subr.mxu0 0.0
    %148 = vmatpush1.msra.mxu0 0.0
    %149 = vmatprep.subr.mxu0 0.0
    %150 = vmatpush1.msra.mxu0 0.0
    %151 = vmatprep.subr.mxu0 0.0
    %152 = vmatpush1.msra.mxu0 0.0
    %153 = vmatprep.mubr.f32.mxu0 0.0
    %154 = vmatmul.mubr.f32.gmra.mrb[0].mxu0 %v67
    %v155 = vpop.f32.mrb[0].mxu0
    %v156 = vadd.f32 %v88, %v155
    %v157 = vpop.f32.mrb[0].mxu0
    %158 = vdwg.mxu0
    %v159 = vmul.f32 %v156, 0.2
    %v160 = vmax.f32 %v156, %v159
    %s161 = scalar_lea.vmem [#allocation5], 128
    %v162 = vld [vmem:[%s161] sm:$0xff]
    %v163 = vld [vmem:[%s161 + $0x8] sm:$0xff]
    %v164 = vld [vmem:[%s161 + $0x10] sm:$0xff]
    %v165 = vld [vmem:[%s161 + $0x18] sm:$0xff]
    %v166 = vld [vmem:[%s161 + $0x20] sm:$0xff]
    %v167 = vld [vmem:[%s161 + $0x28] sm:$0xff]
    %v168 = vld [vmem:[%s161 + $0x30] sm:$0xff]
    %v169 = vld [vmem:[%s161 + $0x38] sm:$0xff]
    %v170 = vld [vmem:[%s161 + $0x40] sm:$0xff]
    %v171 = vld [vmem:[%s161 + $0x48] sm:$0xff]
    %v172 = vld [vmem:[%s161 + $0x50] sm:$0xff]
    %v173 = vld [vmem:[%s161 + $0x58] sm:$0xff]
    %v174 = vld [vmem:[%s161 + $0x60] sm:$0xff]
    %v175 = vld [vmem:[%s161 + $0x68] sm:$0xff]
    %v176 = vld [vmem:[%s161 + $0x70] sm:$0xff]
    %v177 = vld [vmem:[%s161 + $0x78] sm:$0xff]
    %v178 = vld [vmem:[%s2 + $0x1] sm:$0x1]
    %v179 = vlaneseq
    %v180 = vshrl.u32 %v179, 7
    %v181 = vsub.s32 0, %v180
    %v182 = vrot.slane %v178, %v181
    %183 = vmatprep.subr.mxu0 0.0
    %184 = vmatpush1.msra.mxu0 %v162
    %185 = vmatprep.subr.mxu0 0.0
    %186 = vmatpush1.msra.mxu0 %v163
    %187 = vmatprep.subr.mxu0 0.0
    %188 = vmatpush1.msra.mxu0 %v164
    %189 = vmatprep.subr.mxu0 0.0
    %190 = vmatpush1.msra.mxu0 %v165
    %191 = vmatprep.subr.mxu0 0.0
    %192 = vmatpush1.msra.mxu0 %v166
    %193 = vmatprep.subr.mxu0 0.0
    %194 = vmatpush1.msra.mxu0 %v167
    %195 = vmatprep.subr.mxu0 0.0
    %196 = vmatpush1.msra.mxu0 %v168
    %197 = vmatprep.subr.mxu0 0.0
    %198 = vmatpush1.msra.mxu0 %v169
    %199 = vmatprep.subr.mxu0 0.0
    %200 = vmatpush1.msra.mxu0 %v170
    %201 = vmatprep.subr.mxu0 0.0
    %202 = vmatpush1.msra.mxu0 %v171
    %203 = vmatprep.subr.mxu0 0.0
    %204 = vmatpush1.msra.mxu0 %v172
    %205 = vmatprep.subr.mxu0 0.0
    %206 = vmatpush1.msra.mxu0 %v173
    %207 = vmatprep.subr.mxu0 0.0
    %208 = vmatpush1.msra.mxu0 %v174
    %209 = vmatprep.subr.mxu0 0.0
    %210 = vmatpush1.msra.mxu0 %v175
    %211 = vmatprep.subr.mxu0 0.0
    %212 = vmatpush1.msra.mxu0 %v176
    %213 = vmatprep.subr.mxu0 0.0
    %214 = vmatpush1.msra.mxu0 %v177
    %215 = vmatprep.subr.mxu0 0.0
    %216 = vmatpush1.msra.mxu0 0.0
    %217 = vmatprep.subr.mxu0 0.0
    %218 = vmatpush1.msra.mxu0 0.0
    %219 = vmatprep.subr.mxu0 0.0
    %220 = vmatpush1.msra.mxu0 0.0
    %221 = vmatprep.subr.mxu0 0.0
    %222 = vmatpush1.msra.mxu0 0.0
    %223 = vmatprep.subr.mxu0 0.0
    %224 = vmatpush1.msra.mxu0 0.0
    %225 = vmatprep.subr.mxu0 0.0
    %226 = vmatpush1.msra.mxu0 0.0
    %227 = vmatprep.subr.mxu0 0.0
    %228 = vmatpush1.msra.mxu0 0.0
    %229 = vmatprep.subr.mxu0 0.0
    %230 = vmatpush1.msra.mxu0 0.0
    %231 = vmatprep.subr.mxu0 0.0
    %232 = vmatpush1.msra.mxu0 0.0
    %233 = vmatprep.subr.mxu0 0.0
    %234 = vmatpush1.msra.mxu0 0.0
    %235 = vmatprep.subr.mxu0 0.0
    %236 = vmatpush1.msra.mxu0 0.0
    %237 = vmatprep.subr.mxu0 0.0
    %238 = vmatpush1.msra.mxu0 0.0
    %239 = vmatprep.subr.mxu0 0.0
    %240 = vmatpush1.msra.mxu0 0.0
    %241 = vmatprep.subr.mxu0 0.0
    %242 = vmatpush1.msra.mxu0 0.0
    %243 = vmatprep.subr.mxu0 0.0
    %244 = vmatpush1.msra.mxu0 0.0
    %245 = vmatprep.subr.mxu0 0.0
    %246 = vmatpush1.msra.mxu0 0.0
    %247 = vmatprep.mubr.f32.mxu0 0.0
    %248 = vmatmul.mubr.f32.gmra.mrb[0].mxu0 %v160
    %v249 = vpop.f32.mrb[0].mxu0
    %v250 = vadd.f32 %v182, %v249
    %v251 = vpop.f32.mrb[0].mxu0
    %252 = vdwg.mxu0
    %v253 = vmul.f32 %v250, 0.2
    %v254 = vmax.f32 %v250, %v253
    %s255 = scalar_lea.vmem [#allocation5], 256
    %v256 = vld [vmem:[%s255] sm:$0xff]
    %v257 = vld [vmem:[%s255 + $0x8] sm:$0xff]
    %v258 = vld [vmem:[%s255 + $0x10] sm:$0xff]
    %v259 = vld [vmem:[%s255 + $0x18] sm:$0xff]
    %v260 = vld [vmem:[%s255 + $0x20] sm:$0xff]
    %v261 = vld [vmem:[%s255 + $0x28] sm:$0xff]
    %v262 = vld [vmem:[%s255 + $0x30] sm:$0xff]
    %v263 = vld [vmem:[%s255 + $0x38] sm:$0xff]
    %v264 = vld [vmem:[%s255 + $0x40] sm:$0xff]
    %v265 = vld [vmem:[%s255 + $0x48] sm:$0xff]
    %v266 = vld [vmem:[%s255 + $0x50] sm:$0xff]
    %v267 = vld [vmem:[%s255 + $0x58] sm:$0xff]
    %v268 = vld [vmem:[%s255 + $0x60] sm:$0xff]
    %v269 = vld [vmem:[%s255 + $0x68] sm:$0xff]
    %v270 = vld [vmem:[%s255 + $0x70] sm:$0xff]
    %v271 = vld [vmem:[%s255 + $0x78] sm:$0xff]
    %v272 = vld [vmem:[%s2 + $0x2] sm:$0x1]
    %v273 = vlaneseq
    %v274 = vshrl.u32 %v273, 7
    %v275 = vsub.s32 0, %v274
    %v276 = vrot.slane %v272, %v275
    %277 = vmatprep.subr.mxu0 0.0
    %278 = vmatpush1.msra.mxu0 %v256
    %279 = vmatprep.subr.mxu0 0.0
    %280 = vmatpush1.msra.mxu0 %v257
    %281 = vmatprep.subr.mxu0 0.0
    %282 = vmatpush1.msra.mxu0 %v258
    %283 = vmatprep.subr.mxu0 0.0
    %284 = vmatpush1.msra.mxu0 %v259
    %285 = vmatprep.subr.mxu0 0.0
    %286 = vmatpush1.msra.mxu0 %v260
    %287 = vmatprep.subr.mxu0 0.0
    %288 = vmatpush1.msra.mxu0 %v261
    %289 = vmatprep.subr.mxu0 0.0
    %290 = vmatpush1.msra.mxu0 %v262
    %291 = vmatprep.subr.mxu0 0.0
    %292 = vmatpush1.msra.mxu0 %v263
    %293 = vmatprep.subr.mxu0 0.0
    %294 = vmatpush1.msra.mxu0 %v264
    %295 = vmatprep.subr.mxu0 0.0
    %296 = vmatpush1.msra.mxu0 %v265
    %297 = vmatprep.subr.mxu0 0.0
    %298 = vmatpush1.msra.mxu0 %v266
    %299 = vmatprep.subr.mxu0 0.0
    %300 = vmatpush1.msra.mxu0 %v267
    %301 = vmatprep.subr.mxu0 0.0
    %302 = vmatpush1.msra.mxu0 %v268
    %303 = vmatprep.subr.mxu0 0.0
    %304 = vmatpush1.msra.mxu0 %v269
    %305 = vmatprep.subr.mxu0 0.0
    %306 = vmatpush1.msra.mxu0 %v270
    %307 = vmatprep.subr.mxu0 0.0
    %308 = vmatpush1.msra.mxu0 %v271
    %309 = vmatprep.subr.mxu0 0.0
    %310 = vmatpush1.msra.mxu0 0.0
    %311 = vmatprep.subr.mxu0 0.0
    %312 = vmatpush1.msra.mxu0 0.0
    %313 = vmatprep.subr.mxu0 0.0
    %314 = vmatpush1.msra.mxu0 0.0
    %315 = vmatprep.subr.mxu0 0.0
    %316 = vmatpush1.msra.mxu0 0.0
    %317 = vmatprep.subr.mxu0 0.0
    %318 = vmatpush1.msra.mxu0 0.0
    %319 = vmatprep.subr.mxu0 0.0
    %320 = vmatpush1.msra.mxu0 0.0
    %321 = vmatprep.subr.mxu0 0.0
    %322 = vmatpush1.msra.mxu0 0.0
    %323 = vmatprep.subr.mxu0 0.0
    %324 = vmatpush1.msra.mxu0 0.0
    %325 = vmatprep.subr.mxu0 0.0
    %326 = vmatpush1.msra.mxu0 0.0
    %327 = vmatprep.subr.mxu0 0.0
    %328 = vmatpush1.msra.mxu0 0.0
    %329 = vmatprep.subr.mxu0 0.0
    %330 = vmatpush1.msra.mxu0 0.0
    %331 = vmatprep.subr.mxu0 0.0
    %332 = vmatpush1.msra.mxu0 0.0
    %333 = vmatprep.subr.mxu0 0.0
    %334 = vmatpush1.msra.mxu0 0.0
    %335 = vmatprep.subr.mxu0 0.0
    %336 = vmatpush1.msra.mxu0 0.0
    %337 = vmatprep.subr.mxu0 0.0
    %338 = vmatpush1.msra.mxu0 0.0
    %339 = vmatprep.subr.mxu0 0.0
    %340 = vmatpush1.msra.mxu0 0.0
    %341 = vmatprep.mubr.f32.mxu0 0.0
    %342 = vmatmul.mubr.f32.gmra.mrb[0].mxu0 %v254
    %v343 = vpop.f32.mrb[0].mxu0
    %v344 = vadd.f32 %v276, %v343
    %v345 = vpop.f32.mrb[0].mxu0
    %346 = vdwg.mxu0
    %v347 = vmul.f32 %v344, 0.2
    %v348 = vmax.f32 %v344, %v347
    %v349 = vld [vmem:[#allocation7] sm:$0xff]
    %v350 = vld [vmem:[#allocation7 + $0x8] sm:$0xff]
    %v351 = vld [vmem:[#allocation7 + $0x10] sm:$0xff]
    %v352 = vld [vmem:[#allocation7 + $0x18] sm:$0xff]
    %v353 = vld [vmem:[#allocation7 + $0x20] sm:$0xff]
    %v354 = vld [vmem:[#allocation7 + $0x28] sm:$0xff]
    %v355 = vld [vmem:[#allocation7 + $0x30] sm:$0xff]
    %v356 = vld [vmem:[#allocation7 + $0x38] sm:$0xff]
    %v357 = vld [vmem:[#allocation7 + $0x40] sm:$0xff]
    %v358 = vld [vmem:[#allocation7 + $0x48] sm:$0xff]
    %v359 = vld [vmem:[#allocation7 + $0x50] sm:$0xff]
    %v360 = vld [vmem:[#allocation7 + $0x58] sm:$0xff]
    %v361 = vld [vmem:[#allocation7 + $0x60] sm:$0xff]
    %v362 = vld [vmem:[#allocation7 + $0x68] sm:$0xff]
    %v363 = vld [vmem:[#allocation7 + $0x70] sm:$0xff]
    %v364 = vld [vmem:[#allocation7 + $0x78] sm:$0xff]
    %v365 = vld [vmem:[%s4] sm:$0x1]
    %v367 = vlaneseq
    %v368 = vshrl.u32 %v367, 7
    %v369 = vsub.s32 0, %v368
    %v370 = vrot.slane %v365, %v369
    %372 = vmatprep.subr.mxu0 0.0
    %373 = vmatpush1.msra.mxu0 %v349
    %374 = vmatprep.subr.mxu0 0.0
    %375 = vmatpush1.msra.mxu0 %v350
    %376 = vmatprep.subr.mxu0 0.0
    %377 = vmatpush1.msra.mxu0 %v351
    %378 = vmatprep.subr.mxu0 0.0
    %379 = vmatpush1.msra.mxu0 %v352
    %380 = vmatprep.subr.mxu0 0.0
    %381 = vmatpush1.msra.mxu0 %v353
    %382 = vmatprep.subr.mxu0 0.0
    %383 = vmatpush1.msra.mxu0 %v354
    %384 = vmatprep.subr.mxu0 0.0
    %385 = vmatpush1.msra.mxu0 %v355
    %386 = vmatprep.subr.mxu0 0.0
    %387 = vmatpush1.msra.mxu0 %v356
    %388 = vmatprep.subr.mxu0 0.0
    %389 = vmatpush1.msra.mxu0 %v357
    %390 = vmatprep.subr.mxu0 0.0
    %391 = vmatpush1.msra.mxu0 %v358
    %392 = vmatprep.subr.mxu0 0.0
    %393 = vmatpush1.msra.mxu0 %v359
    %394 = vmatprep.subr.mxu0 0.0
    %395 = vmatpush1.msra.mxu0 %v360
    %396 = vmatprep.subr.mxu0 0.0
    %397 = vmatpush1.msra.mxu0 %v361
    %398 = vmatprep.subr.mxu0 0.0
    %399 = vmatpush1.msra.mxu0 %v362
    %400 = vmatprep.subr.mxu0 0.0
    %401 = vmatpush1.msra.mxu0 %v363
    %402 = vmatprep.subr.mxu0 0.0
    %403 = vmatpush1.msra.mxu0 %v364
    %404 = vmatprep.subr.mxu0 0.0
    %405 = vmatpush1.msra.mxu0 0.0
    %406 = vmatprep.subr.mxu0 0.0
    %407 = vmatpush1.msra.mxu0 0.0
    %408 = vmatprep.subr.mxu0 0.0
    %409 = vmatpush1.msra.mxu0 0.0
    %410 = vmatprep.subr.mxu0 0.0
    %411 = vmatpush1.msra.mxu0 0.0
    %412 = vmatprep.subr.mxu0 0.0
    %413 = vmatpush1.msra.mxu0 0.0
    %414 = vmatprep.subr.mxu0 0.0
    %415 = vmatpush1.msra.mxu0 0.0
    %416 = vmatprep.subr.mxu0 0.0
    %417 = vmatpush1.msra.mxu0 0.0
    %418 = vmatprep.subr.mxu0 0.0
    %419 = vmatpush1.msra.mxu0 0.0
    %420 = vmatprep.subr.mxu0 0.0
    %421 = vmatpush1.msra.mxu0 0.0
    %422 = vmatprep.subr.mxu0 0.0
    %423 = vmatpush1.msra.mxu0 0.0
    %424 = vmatprep.subr.mxu0 0.0
    %425 = vmatpush1.msra.mxu0 0.0
    %426 = vmatprep.subr.mxu0 0.0
    %427 = vmatpush1.msra.mxu0 0.0
    %428 = vmatprep.subr.mxu0 0.0
    %429 = vmatpush1.msra.mxu0 0.0
    %430 = vmatprep.subr.mxu0 0.0
    %431 = vmatpush1.msra.mxu0 0.0
    %432 = vmatprep.subr.mxu0 0.0
    %433 = vmatpush1.msra.mxu0 0.0
    %434 = vmatprep.subr.mxu0 0.0
    %435 = vmatpush1.msra.mxu0 0.0
    %436 = vmatprep.mubr.f32.mxu0 0.0
    %437 = vmatmul.mubr.f32.gmra.mrb[0].mxu0 %v348
    %v438 = vpop.f32.mrb[0].mxu0
    %v439 = vadd.f32 %v370, %v438
    %v440 = vpop.f32.mrb[0].mxu0
    %441 = vdwg.mxu0
    %442 = vst [vmem:[#allocation8] sm:$0xff] %v439
    // Predicated region
    $region34: #{tpu_custom_call.1} parent=1 // pred_check
      _
    $region35: #{tpu_custom_call.1} parent=1 // pred_check_branch
      %444 = sbr.rel (0) target = $region37
    $region36: #{tpu_custom_call.1} parent=1 // pred_region
      %s446 = ssub.s32 128, 128
      %447 = vsyncadd [#allocation4], %s446
      %s449 = sshll.u32 [#allocation8], 4
      %s450 = int_to_ptr.vmem [resolvable:$true] %s449
      %452 = dma.vmem_to_hbm [thread:$0]  %s450, 128, %s5, [#allocation4]
    $region37: #{tpu_custom_call.1} parent=1 // pred_fallthru
      _
    // Predicated region
    $region38: #{tpu_custom_call.1} parent=1 // pred_check
      _
    $region39: #{tpu_custom_call.1} parent=1 // pred_check_branch
      %454 = sbr.rel (0) target = $region41
    $region40: #{tpu_custom_call.1} parent=1 // pred_region
      %455 = dma.done [#allocation4], 128
    $region41: #{tpu_custom_call.1} parent=1 // pred_fallthru
      _
    %456 = vsyncpa [#allocation3], 1
    %457 = vsyncpa [#allocation6], 1
    %458 = vsyncpa [#allocation4], 1

</llo_original>
